<compile_context>
chip_gen: v6e
topology: v6e:2x2x1
jax: 0.10.0
libtpu: 0.0.40
codegen_flags: <defaults>
</compile_context>

<pallas_src>
import functools

import jax
import jax.numpy as jnp
from jax import lax
from jax.experimental import pallas as pl
from jax.experimental.pallas import tpu as pltpu


# ----------------------------- Pallas kernel ------------------------------ #

def _stack_cnn_fused_kernel(x_ref, *refs, n_layers, pad, ksize):
    """Fused StackCNN forward for the whole batch in one grid step.

    x_ref: (N, L, C_in)  NLC layout (channels on the lane axis)
    refs : w_0, b_0, ..., w_{n-1}, b_{n-1}, o_ref
           w_i: (K*C_prev, C_out)  BN-folded im2col weight, (k, c) row order
           b_i: (1, C_out)         BN-folded bias
    o_ref: (N, C_out)    global-max-pooled output
    """
    o_ref = refs[-1]
    wb = refs[:-1]

    h = x_ref[...]                                    # (N, L, C_in) f32, stays in VMEM/vregs
    n = h.shape[0]

    for li in range(n_layers):                        # static layer loop, traced once
        w = wb[2 * li][...]                           # (K*C_prev, C_out)
        b = wb[2 * li + 1][...]                       # (1, C_out)
        c_prev = h.shape[-1]
        cout = w.shape[-1]

        # Zero-pad the length axis entirely on-chip (no HBM traffic, no extra XLA op).
        zeros = jnp.zeros((n, pad, c_prev), jnp.float32)
        h_pad = jnp.concatenate([zeros, h, zeros], axis=1)        # (N, L+2p, C_prev)
        out_len = h_pad.shape[1] - ksize + 1

        # im2col: concat the K shifted views on the lane axis -> (N, out_len, K*C_prev),
        # then fold batch into the matmul M dimension -> a single MXU push per layer.
        cols = jnp.concatenate(
            [h_pad[:, k:k + out_len, :] for k in range(ksize)], axis=-1)
        cols = cols.reshape(n * out_len, ksize * c_prev)

        y = jnp.dot(cols, w, preferred_element_type=jnp.float32) + b
        h = jnp.maximum(y, 0.0).reshape(n, out_len, cout)

    # AdaptiveMaxPool1d(1) + squeeze(-1): global max over length on live registers.
    o_ref[...] = jnp.max(h, axis=1).astype(o_ref.dtype)


# ------------------------------- JAX glue ---------------------------------- #

def init_stack_cnn_params(key, layer_num, in_channels, out_channels, kernel_size,
                          eps=1e-5):
    """Deterministic synthetic parameters; BN (eval mode) folded into conv w/b.

    Returns list of (w_kio, b_o) with w_kio: (K, C_in, C_out), b_o: (C_out,).
    """
    params = []
    c_prev = in_channels
    for _ in range(layer_num):
        key, k1, k2, k3, k4, k5, k6 = jax.random.split(key, 7)
        w = 0.1 * jax.random.normal(k1, (out_channels, c_prev, kernel_size), jnp.float32)
        b = 0.1 * jax.random.normal(k2, (out_channels,), jnp.float32)
        gamma = 1.0 + 0.1 * jax.random.normal(k3, (out_channels,), jnp.float32)
        beta = 0.1 * jax.random.normal(k4, (out_channels,), jnp.float32)
        mean = 0.1 * jax.random.normal(k5, (out_channels,), jnp.float32)
        var = jnp.abs(jax.random.normal(k6, (out_channels,), jnp.float32)) + 0.5
        scale = gamma / jnp.sqrt(var + eps)
        w_fold = w * scale[:, None, None]                    # (C_out, C_in, K)
        b_fold = (b - mean) * scale + beta                   # (C_out,)
        w_kio = jnp.transpose(w_fold, (2, 1, 0))             # (K, C_in, C_out)
        params.append((w_kio, b_fold))
        c_prev = out_channels
    return params


def stack_cnn_forward(x_ncl, params, *, pad):
    """Matches StackCNN.forward: x (N, C_in, L) -> (N, C_out), one fused pallas_call."""
    n, _, _ = x_ncl.shape
    ksize = params[0][0].shape[0]
    c_out = params[0][0].shape[-1]
    x_nlc = jnp.transpose(x_ncl, (0, 2, 1))                  # NCL -> NLC (channels on lanes)

    flat_wb = []
    for w_kio, b_o in params:
        k, ci, co = w_kio.shape
        flat_wb.append(w_kio.reshape(k * ci, co))            # (K*C_in, C_out), (k,c) row order
        flat_wb.append(b_o.reshape(1, co))

    kernel = functools.partial(_stack_cnn_fused_kernel,
                               n_layers=len(params), pad=pad, ksize=ksize)
    return pl.pallas_call(
        kernel,
        out_shape=jax.ShapeDtypeStruct((n, c_out), jnp.float32),
        in_specs=[pl.BlockSpec(memory_space=pltpu.MemorySpace.VMEM)] * (1 + len(flat_wb)),
        out_specs=pl.BlockSpec(memory_space=pltpu.MemorySpace.VMEM),
    )(x_nlc, *flat_wb)


def reference_forward(x_ncl, params, *, pad):
    """Pure-JAX reference (same eval-mode BN-folded semantics)."""
    h = x_ncl
    for w_kio, b_o in params:
        w_oik = jnp.transpose(w_kio, (2, 1, 0))              # (C_out, C_in, K)
        h = lax.conv_general_dilated(
            h, w_oik, window_strides=(1,), padding=[(pad, pad)],
            dimension_numbers=("NCH", "OIH", "NCH"),
            precision=lax.Precision.HIGHEST)
        h = jnp.maximum(h + b_o[None, :, None], 0.0)
    return jnp.max(h, axis=-1)


# --------------------------------- main ------------------------------------ #

if __name__ == "__main__":
    # StackCNN(layer_num=3, in_channels=4, out_channels=32, kernel_size=3, padding=1)
    layer_num, in_ch, out_ch, ksize, pad = 3, 4, 32, 3, 1
    batch, seq_len = 2, 16

    key = jax.random.PRNGKey(0)
    key, kx = jax.random.split(key)
    x = jax.random.normal(kx, (batch, in_ch, seq_len), jnp.float32)   # NCL like PyTorch

    params = init_stack_cnn_params(key, layer_num, in_ch, out_ch, ksize)

    out = stack_cnn_forward(x, params, pad=pad)
    out = jax.block_until_ready(out)

    ref = jax.block_until_ready(reference_forward(x, params, pad=pad))
    assert out.shape == (batch, out_ch), out.shape
    assert jnp.allclose(out, ref, atol=5e-3, rtol=5e-3), float(jnp.max(jnp.abs(out - ref)))

    print("KERNEL_OK")
</pallas_src>

<mosaic_0001>
module attributes {stable_mosaic.version = 11 : i64} {
  func.func @_stack_cnn_fused_kernel(%arg0: memref<2x16x4xf32, #tpu.memory_space<vmem>>, %arg1: memref<12x32xf32, #tpu.memory_space<vmem>>, %arg2: memref<1x32xf32, #tpu.memory_space<vmem>>, %arg3: memref<96x32xf32, #tpu.memory_space<vmem>>, %arg4: memref<1x32xf32, #tpu.memory_space<vmem>>, %arg5: memref<96x32xf32, #tpu.memory_space<vmem>>, %arg6: memref<1x32xf32, #tpu.memory_space<vmem>>, %arg7: memref<2x32xf32, #tpu.memory_space<vmem>>) attributes {dimension_semantics = [], scalar_prefetch = 0 : i64, scratch_operands = 0 : i64, tpu.core_type = #tpu.core_type<tc>} {
    %c0 = arith.constant 0 : index
    %c0_0 = arith.constant 0 : index
    %c0_1 = arith.constant 0 : index
    %0 = vector.load %arg0[%c0, %c0_0, %c0_1] : memref<2x16x4xf32, #tpu.memory_space<vmem>>, vector<2x16x4xf32>
    %c0_2 = arith.constant 0 : index
    %c0_3 = arith.constant 0 : index
    %1 = vector.load %arg1[%c0_2, %c0_3] : memref<12x32xf32, #tpu.memory_space<vmem>>, vector<12x32xf32>
    %c0_4 = arith.constant 0 : index
    %c0_5 = arith.constant 0 : index
    %2 = vector.load %arg2[%c0_4, %c0_5] : memref<1x32xf32, #tpu.memory_space<vmem>>, vector<1x32xf32>
    %cst = arith.constant 0.000000e+00 : f32
    %3 = vector.broadcast %cst : f32 to vector<2x1x4xf32>
    %4 = tpu.concatenate %3, %0, %3 in 1 : vector<2x1x4xf32>, vector<2x16x4xf32>, vector<2x1x4xf32> -> vector<2x18x4xf32>
    %5 = vector.extract_strided_slice %4 {offsets = [0, 0, 0], sizes = [2, 16, 4], strides = [1, 1, 1]} : vector<2x18x4xf32> to vector<2x16x4xf32>
    %6 = vector.extract_strided_slice %4 {offsets = [0, 1, 0], sizes = [2, 16, 4], strides = [1, 1, 1]} : vector<2x18x4xf32> to vector<2x16x4xf32>
    %7 = vector.extract_strided_slice %4 {offsets = [0, 2, 0], sizes = [2, 16, 4], strides = [1, 1, 1]} : vector<2x18x4xf32> to vector<2x16x4xf32>
    %8 = tpu.concatenate %5, %6, %7 in 2 : vector<2x16x4xf32>, vector<2x16x4xf32>, vector<2x16x4xf32> -> vector<2x16x12xf32>
    %9 = vector.shape_cast %8 : vector<2x16x12xf32> to vector<32x12xf32>
    %cst_6 = arith.constant dense<0.000000e+00> : vector<32x32xf32>
    %10 = tpu.matmul %9, %1, %cst_6 {dimension_numbers = #tpu.dot_dimension_numbers<[1], [0], [0], [1], [0, 0, 1, 1], [], []>} : vector<32x12xf32>, vector<12x32xf32>, vector<32x32xf32> -> vector<32x32xf32>
    %11 = vector.broadcast %2 : vector<1x32xf32> to vector<32x32xf32>
    %12 = arith.addf %10, %11 : vector<32x32xf32>
    %cst_7 = arith.constant 0.000000e+00 : f32
    %13 = vector.broadcast %cst_7 : f32 to vector<32x32xf32>
    %14 = arith.maximumf %12, %13 : vector<32x32xf32>
    %15 = vector.shape_cast %14 : vector<32x32xf32> to vector<2x16x32xf32>
    %c0_8 = arith.constant 0 : index
    %c0_9 = arith.constant 0 : index
    %16 = vector.load %arg3[%c0_8, %c0_9] : memref<96x32xf32, #tpu.memory_space<vmem>>, vector<96x32xf32>
    %c0_10 = arith.constant 0 : index
    %c0_11 = arith.constant 0 : index
    %17 = vector.load %arg4[%c0_10, %c0_11] : memref<1x32xf32, #tpu.memory_space<vmem>>, vector<1x32xf32>
    %cst_12 = arith.constant 0.000000e+00 : f32
    %18 = vector.broadcast %cst_12 : f32 to vector<2x1x32xf32>
    %19 = tpu.concatenate %18, %15, %18 in 1 : vector<2x1x32xf32>, vector<2x16x32xf32>, vector<2x1x32xf32> -> vector<2x18x32xf32>
    %20 = vector.extract_strided_slice %19 {offsets = [0, 0, 0], sizes = [2, 16, 32], strides = [1, 1, 1]} : vector<2x18x32xf32> to vector<2x16x32xf32>
    %21 = vector.extract_strided_slice %19 {offsets = [0, 1, 0], sizes = [2, 16, 32], strides = [1, 1, 1]} : vector<2x18x32xf32> to vector<2x16x32xf32>
    %22 = vector.extract_strided_slice %19 {offsets = [0, 2, 0], sizes = [2, 16, 32], strides = [1, 1, 1]} : vector<2x18x32xf32> to vector<2x16x32xf32>
    %23 = tpu.concatenate %20, %21, %22 in 2 : vector<2x16x32xf32>, vector<2x16x32xf32>, vector<2x16x32xf32> -> vector<2x16x96xf32>
    %24 = vector.shape_cast %23 : vector<2x16x96xf32> to vector<32x96xf32>
    %cst_13 = arith.constant dense<0.000000e+00> : vector<32x32xf32>
    %25 = tpu.matmul %24, %16, %cst_13 {dimension_numbers = #tpu.dot_dimension_numbers<[1], [0], [0], [1], [0, 0, 1, 1], [], []>} : vector<32x96xf32>, vector<96x32xf32>, vector<32x32xf32> -> vector<32x32xf32>
    %26 = vector.broadcast %17 : vector<1x32xf32> to vector<32x32xf32>
    %27 = arith.addf %25, %26 : vector<32x32xf32>
    %cst_14 = arith.constant 0.000000e+00 : f32
    %28 = vector.broadcast %cst_14 : f32 to vector<32x32xf32>
    %29 = arith.maximumf %27, %28 : vector<32x32xf32>
    %30 = vector.shape_cast %29 : vector<32x32xf32> to vector<2x16x32xf32>
    %c0_15 = arith.constant 0 : index
    %c0_16 = arith.constant 0 : index
    %31 = vector.load %arg5[%c0_15, %c0_16] : memref<96x32xf32, #tpu.memory_space<vmem>>, vector<96x32xf32>
    %c0_17 = arith.constant 0 : index
    %c0_18 = arith.constant 0 : index
    %32 = vector.load %arg6[%c0_17, %c0_18] : memref<1x32xf32, #tpu.memory_space<vmem>>, vector<1x32xf32>
    %cst_19 = arith.constant 0.000000e+00 : f32
    %33 = vector.broadcast %cst_19 : f32 to vector<2x1x32xf32>
    %34 = tpu.concatenate %33, %30, %33 in 1 : vector<2x1x32xf32>, vector<2x16x32xf32>, vector<2x1x32xf32> -> vector<2x18x32xf32>
    %35 = vector.extract_strided_slice %34 {offsets = [0, 0, 0], sizes = [2, 16, 32], strides = [1, 1, 1]} : vector<2x18x32xf32> to vector<2x16x32xf32>
    %36 = vector.extract_strided_slice %34 {offsets = [0, 1, 0], sizes = [2, 16, 32], strides = [1, 1, 1]} : vector<2x18x32xf32> to vector<2x16x32xf32>
    %37 = vector.extract_strided_slice %34 {offsets = [0, 2, 0], sizes = [2, 16, 32], strides = [1, 1, 1]} : vector<2x18x32xf32> to vector<2x16x32xf32>
    %38 = tpu.concatenate %35, %36, %37 in 2 : vector<2x16x32xf32>, vector<2x16x32xf32>, vector<2x16x32xf32> -> vector<2x16x96xf32>
    %39 = vector.shape_cast %38 : vector<2x16x96xf32> to vector<32x96xf32>
    %cst_20 = arith.constant dense<0.000000e+00> : vector<32x32xf32>
    %40 = tpu.matmul %39, %31, %cst_20 {dimension_numbers = #tpu.dot_dimension_numbers<[1], [0], [0], [1], [0, 0, 1, 1], [], []>} : vector<32x96xf32>, vector<96x32xf32>, vector<32x32xf32> -> vector<32x32xf32>
    %41 = vector.broadcast %32 : vector<1x32xf32> to vector<32x32xf32>
    %42 = arith.addf %40, %41 : vector<32x32xf32>
    %cst_21 = arith.constant 0.000000e+00 : f32
    %43 = vector.broadcast %cst_21 : f32 to vector<32x32xf32>
    %44 = arith.maximumf %42, %43 : vector<32x32xf32>
    %45 = vector.shape_cast %44 : vector<32x32xf32> to vector<2x16x32xf32>
    %cst_22 = arith.constant dense<0xFF800000> : vector<2x32xf32>
    %46 = vector.multi_reduction <maximumf>, %45, %cst_22 [1] : vector<2x16x32xf32> to vector<2x32xf32>
    %c0_23 = arith.constant 0 : index
    %c0_24 = arith.constant 0 : index
    %47 = vector.load %arg7[%c0_23, %c0_24] : memref<2x32xf32, #tpu.memory_space<vmem>>, vector<2x32xf32>
    tpu.vector_store %arg7[%c0_23, %c0_24], %46 {strides = array<i32>} : memref<2x32xf32, #tpu.memory_space<vmem>>, vector<2x32xf32>,
    return
  }
}

</mosaic_0001>

<llo_original>
// kernel: tpu_custom_call.1
$region0: #{tpu_custom_call.1}
  #allocation0 [shape = 'u32[]', space=smem, size = 0x4, offset = 0x4, fixed_abs, tag = 'smem constant byte address 0x4 - core index']
  #allocation1 [shape = 'u32[144,128]{1,0:T(1,128)}', space=vmem, size = 0x12000, scoped, tag = 'internal scratch']
  %s0 = inlined_call_operand.vmem [shape: f32[2,16,4], index: 0, kind: input, shape index: {}]
  %s1 = inlined_call_operand.vmem [shape: f32[12,32], index: 1, kind: input, shape index: {}]
  %s2 = inlined_call_operand.vmem [shape: f32[1,32], index: 2, kind: input, shape index: {}]
  %s3 = inlined_call_operand.vmem [shape: f32[96,32], index: 3, kind: input, shape index: {}]
  %s4 = inlined_call_operand.vmem [shape: f32[1,32], index: 4, kind: input, shape index: {}]
  %s5 = inlined_call_operand.vmem [shape: f32[96,32], index: 5, kind: input, shape index: {}]
  %s6 = inlined_call_operand.vmem [shape: f32[1,32], index: 6, kind: input, shape index: {}]
  %s7 = inlined_call_operand.hbm [shape: f32[2,32], index: 7, kind: output, shape index: {}]
  %s8 = sld [smem:[#allocation0]]
  $region38: #{tpu_custom_call.1} parent=0
    _
  %s10 = ssub.s32 1, %s8
  %s11 = scalar_select 0, %s10, %s8
  $region1: #{tpu_custom_call.1} parent=0
    #allocation2 [shape = 'u8[1024]{0}', space=vmem, size = 0x400, scoped, tag = 'output window, operand 0, single buffered']
    #allocation3 [shape = 's32[1]{0}', space=sflag, size = 0x4, scoped, tag = 'scoped memory for tpu_custom_call.1']
    %12 = vsyncpa [#allocation3], 0
    // Predicated region
    $region2: #{tpu_custom_call.1} parent=1 // pred_check
      _
    $region3: #{tpu_custom_call.1} parent=1 // pred_check_branch
      %14 = sbr.rel (0) target = $region5
    $region4: #{tpu_custom_call.1} parent=1 // pred_region
      _
    $region5: #{tpu_custom_call.1} parent=1 // pred_fallthru
      _
    // Predicated region
    $region6: #{tpu_custom_call.1} parent=1 // pred_check
      _
    $region7: #{tpu_custom_call.1} parent=1 // pred_check_branch
      %16 = sbr.rel (0) target = $region9
    $region8: #{tpu_custom_call.1} parent=1 // pred_region
      _
    $region9: #{tpu_custom_call.1} parent=1 // pred_fallthru
      _
    // Predicated region
    $region10: #{tpu_custom_call.1} parent=1 // pred_check
      _
    $region11: #{tpu_custom_call.1} parent=1 // pred_check_branch
      %18 = sbr.rel (0) target = $region13
    $region12: #{tpu_custom_call.1} parent=1 // pred_region
      _
    $region13: #{tpu_custom_call.1} parent=1 // pred_fallthru
      _
    // Predicated region
    $region14: #{tpu_custom_call.1} parent=1 // pred_check
      _
    $region15: #{tpu_custom_call.1} parent=1 // pred_check_branch
      %20 = sbr.rel (0) target = $region17
    $region16: #{tpu_custom_call.1} parent=1 // pred_region
      _
    $region17: #{tpu_custom_call.1} parent=1 // pred_fallthru
      _
    // Predicated region
    $region18: #{tpu_custom_call.1} parent=1 // pred_check
      _
    $region19: #{tpu_custom_call.1} parent=1 // pred_check_branch
      %22 = sbr.rel (0) target = $region21
    $region20: #{tpu_custom_call.1} parent=1 // pred_region
      _
    $region21: #{tpu_custom_call.1} parent=1 // pred_fallthru
      _
    // Predicated region
    $region22: #{tpu_custom_call.1} parent=1 // pred_check
      _
    $region23: #{tpu_custom_call.1} parent=1 // pred_check_branch
      %24 = sbr.rel (0) target = $region25
    $region24: #{tpu_custom_call.1} parent=1 // pred_region
      _
    $region25: #{tpu_custom_call.1} parent=1 // pred_fallthru
      _
    // Predicated region
    $region26: #{tpu_custom_call.1} parent=1 // pred_check
      _
    $region27: #{tpu_custom_call.1} parent=1 // pred_check_branch
      %26 = sbr.rel (0) target = $region29
    $region28: #{tpu_custom_call.1} parent=1 // pred_region
      _
    $region29: #{tpu_custom_call.1} parent=1 // pred_fallthru
      _
    %v27 = vld [vmem:[%s0] sm:$0xff]
    %v28 = vld [vmem:[%s0 + $0x8] sm:$0xff]
    %v29 = vld [vmem:[%s0 + $0x10] sm:$0xff]
    %v30 = vld [vmem:[%s0 + $0x18] sm:$0xff]
    %v31 = vld [vmem:[%s1] sm:$0xff]
    %v32 = vld [vmem:[%s1 + $0x8] sm:$0xf]
    %v33 = vld [vmem:[%s2] sm:$0x1]
    %vm38 = vcmask 1040384
    %v39 = vrot.slane %v27, 7
    %v40 = vrot.slane %v28, 7
    %v41 = vsel %vm38, %v39, %v40
    %v42 = vrot.slane %v29, 7
    %v43 = vrot.slane %v30, 7
    %v44 = vsel %vm38, %v42, %v43
    %v51 = vsel %vm38, 0.0, %v39
    %v52 = vsel %vm38, 0.0, %v42
    %v53 = vsel %vm38, %v40, 0.0
    %v54 = vsel %vm38, %v43, 0.0
    %vm59 = vcmask 1046528
    %v60 = vrot.slane %v51, 1
    %v61 = vrot.slane %v41, 1
    %v62 = vsel %vm59, %v60, %v61
    %v63 = vrot.slane %v53, 1
    %v64 = vsel %vm59, %v61, %v63
    %v65 = vrot.slane %v52, 1
    %v66 = vrot.slane %v44, 1
    %v67 = vsel %vm59, %v65, %v66
    %v68 = vrot.slane %v54, 1
    %v69 = vsel %vm59, %v66, %v68
    %70 = vrot.lane.b32.xlu0 %v62, 4
    %v71 = vpop.permute.xlu0 %70
    %72 = vrot.lane.b32.xlu0 %v64, 4
    %v73 = vpop.permute.xlu0 %72
    %74 = vrot.lane.b32.xlu0 %v67, 4
    %v75 = vpop.permute.xlu0 %74
    %76 = vrot.lane.b32.xlu0 %v69, 4
    %v77 = vpop.permute.xlu0 %76
    %vm82 = vcmask 1045504
    %v83 = vrot.slane %v51, 2
    %v84 = vrot.slane %v41, 2
    %v85 = vsel %vm82, %v83, %v84
    %v86 = vrot.slane %v53, 2
    %v87 = vsel %vm82, %v84, %v86
    %v88 = vrot.slane %v52, 2
    %v89 = vrot.slane %v44, 2
    %v90 = vsel %vm82, %v88, %v89
    %v91 = vrot.slane %v54, 2
    %v92 = vsel %vm82, %v89, %v91
    %93 = vrot.lane.b32.xlu0 %v85, 8
    %v94 = vpop.permute.xlu0 %93
    %95 = vrot.lane.b32.xlu0 %v87, 8
    %v96 = vpop.permute.xlu0 %95
    %97 = vrot.lane.b32.xlu0 %v90, 8
    %v98 = vpop.permute.xlu0 %97
    %99 = vrot.lane.b32.xlu0 %v92, 8
    %v100 = vpop.permute.xlu0 %99
    %vm105 = vcmask 31744
    %v106 = vsel %vm105, %v51, %v71
    %v107 = vsel %vm105, %v41, %v73
    %v108 = vsel %vm105, %v52, %v75
    %v109 = vsel %vm105, %v44, %v77
    %vm110 = vcmask 64512
    %v111 = vsel %vm110, %v106, %v94
    %v112 = vsel %vm110, %v107, %v96
    %v113 = vsel %vm110, %v108, %v98
    %v114 = vsel %vm110, %v109, %v100
    %v116 = vlaneseq
    %v117 = vshrl.u32 %v116, 7
    %v118 = vsub.s32 0, %v117
    %v119 = vrot.slane %v33, %v118
    %vm121 = vcmask 97280
    %v123 = vsel %vm121, %v111, 0
    %v126 = vsel %vm121, %v112, 0
    %v129 = vsel %vm121, %v113, 0
    %v132 = vsel %vm121, %v114, 0
    %vm134 = vcmask 1043456
    %v136 = vsel %vm134, %v32, 0
    %138 = vmatprep.subr.mxu0 0.0
    %139 = vmatpush1.msra.mxu0 0.0
    %140 = vmatprep.subr.mxu0 0.0
    %141 = vmatpush1.msra.mxu0 0.0
    %142 = vmatprep.subr.mxu0 0.0
    %143 = vmatpush1.msra.mxu0 0.0
    %144 = vmatprep.subr.mxu0 0.0
    %145 = vmatpush1.msra.mxu0 0.0
    %146 = vmatprep.subr.mxu0 0.0
    %147 = vmatpush1.msra.mxu0 0.0
    %148 = vmatprep.subr.mxu0 0.0
    %149 = vmatpush1.msra.mxu0 0.0
    %150 = vmatprep.subr.mxu0 0.0
    %151 = vmatpush1.msra.mxu0 0.0
    %152 = vmatprep.subr.mxu0 0.0
    %153 = vmatpush1.msra.mxu0 0.0
    %154 = vmatprep.subr.mxu0 0.0
    %155 = vmatpush1.msra.mxu0 0.0
    %156 = vmatprep.subr.mxu0 0.0
    %157 = vmatpush1.msra.mxu0 0.0
    %158 = vmatprep.subr.mxu0 0.0
    %159 = vmatpush1.msra.mxu0 0.0
    %160 = vmatprep.subr.mxu0 0.0
    %161 = vmatpush1.msra.mxu0 0.0
    %162 = vmatprep.subr.mxu0 0.0
    %163 = vmatpush1.msra.mxu0 0.0
    %164 = vmatprep.subr.mxu0 0.0
    %165 = vmatpush1.msra.mxu0 0.0
    %166 = vmatprep.subr.mxu0 0.0
    %167 = vmatpush1.msra.mxu0 %v136
    %168 = vmatprep.subr.mxu0 0.0
    %169 = vmatpush1.msra.mxu0 %v31
    %170 = vmatprep.subr.mxu0 0.0
    %171 = vmatpush2.msra.mxu0 0.0
    %172 = vmatprep.subr.mxu0 0.0
    %173 = vmatpush2.msra.mxu0 0.0
    %174 = vmatprep.subr.mxu0 0.0
    %175 = vmatpush2.msra.mxu0 0.0
    %176 = vmatprep.subr.mxu0 0.0
    %177 = vmatpush2.msra.mxu0 0.0
    %178 = vmatprep.subr.mxu0 0.0
    %179 = vmatpush2.msra.mxu0 0.0
    %180 = vmatprep.subr.mxu0 0.0
    %181 = vmatpush2.msra.mxu0 0.0
    %182 = vmatprep.subr.mxu0 0.0
    %183 = vmatpush2.msra.mxu0 0.0
    %184 = vmatprep.subr.mxu0 0.0
    %185 = vmatpush2.msra.mxu0 0.0
    %186 = vmatprep.subr.mxu0 0.0
    %187 = vmatpush2.msra.mxu0 0.0
    %188 = vmatprep.subr.mxu0 0.0
    %189 = vmatpush2.msra.mxu0 0.0
    %190 = vmatprep.subr.mxu0 0.0
    %191 = vmatpush2.msra.mxu0 0.0
    %192 = vmatprep.subr.mxu0 0.0
    %193 = vmatpush2.msra.mxu0 0.0
    %194 = vmatprep.subr.mxu0 0.0
    %195 = vmatpush2.msra.mxu0 0.0
    %196 = vmatprep.subr.mxu0 0.0
    %197 = vmatpush2.msra.mxu0 0.0
    %198 = vmatprep.subr.mxu0 0.0
    %199 = vmatpush2.msra.mxu0 0.0
    %200 = vmatprep.subr.mxu0 0.0
    %201 = vmatpush2.msra.mxu0 0.0
    %202 = vmatprep.mubr.f32.mxu0 0.0
    %203 = vmatmul.mubr.f32.gmra.mxu0 %v123
    %v204 = vpop.f32.mrf.mxu0
    %v205 = vadd.f32 %v119, %v204
    %v206 = vpop.f32.mrf.mxu0
    %207 = vmatprep.mubr.f32.mxu0 0.0
    %208 = vmatmul.mubr.f32.gmra.mxu0 %v126
    %v209 = vpop.f32.mrf.mxu0
    %v210 = vadd.f32 %v119, %v209
    %v211 = vpop.f32.mrf.mxu0
    %212 = vmatprep.mubr.f32.mxu0 0.0
    %213 = vmatmul.mubr.f32.gmra.mxu0 %v129
    %v214 = vpop.f32.mrf.mxu0
    %v215 = vadd.f32 %v119, %v214
    %v216 = vpop.f32.mrf.mxu0
    %217 = vmatprep.mubr.f32.mxu0 0.0
    %218 = vmatmul.mubr.f32.gmra.mxu0 %v132
    %v219 = vpop.f32.mrf.mxu0
    %v220 = vadd.f32 %v119, %v219
    %v221 = vpop.f32.mrf.mxu0
    %222 = vdwg.mxu0
    %v223 = vmax.f32 %v205, 0.0
    %v224 = vmax.f32 %v210, 0.0
    %v225 = vmax.f32 %v215, 0.0
    %v226 = vmax.f32 %v220, 0.0
    %v227 = vld [vmem:[%s3] sm:$0xff]
    %v228 = vld [vmem:[%s3 + $0x8] sm:$0xff]
    %v229 = vld [vmem:[%s3 + $0x10] sm:$0xff]
    %v230 = vld [vmem:[%s3 + $0x18] sm:$0xff]
    %v231 = vld [vmem:[%s3 + $0x20] sm:$0xff]
    %v232 = vld [vmem:[%s3 + $0x28] sm:$0xff]
    %v233 = vld [vmem:[%s3 + $0x30] sm:$0xff]
    %v234 = vld [vmem:[%s3 + $0x38] sm:$0xff]
    %v235 = vld [vmem:[%s3 + $0x40] sm:$0xff]
    %v236 = vld [vmem:[%s3 + $0x48] sm:$0xff]
    %v237 = vld [vmem:[%s3 + $0x50] sm:$0xff]
    %v238 = vld [vmem:[%s3 + $0x58] sm:$0xff]
    %v239 = vld [vmem:[%s4] sm:$0x1]
    %v244 = vrot.slane %v223, 7
    %v245 = vrot.slane %v224, 7
    %v246 = vsel %vm38, %v244, %v245
    %v247 = vrot.slane %v225, 7
    %v248 = vrot.slane %v226, 7
    %v249 = vsel %vm38, %v247, %v248
    %v256 = vsel %vm38, 0.0, %v244
    %v257 = vsel %vm38, 0.0, %v247
    %v258 = vsel %vm38, %v245, 0.0
    %v259 = vsel %vm38, %v248, 0.0
    %v264 = vrot.slane %v256, 1
    %v265 = vrot.slane %v246, 1
    %v266 = vsel %vm59, %v264, %v265
    %v267 = vrot.slane %v258, 1
    %v268 = vsel %vm59, %v265, %v267
    %v269 = vrot.slane %v257, 1
    %v270 = vrot.slane %v249, 1
    %v271 = vsel %vm59, %v269, %v270
    %v272 = vrot.slane %v259, 1
    %v273 = vsel %vm59, %v270, %v272
    %274 = vrot.lane.b32.xlu0 %v266, 32
    %v275 = vpop.permute.xlu0 %274
    %276 = vrot.lane.b32.xlu0 %v268, 32
    %v277 = vpop.permute.xlu0 %276
    %278 = vrot.lane.b32.xlu0 %v271, 32
    %v279 = vpop.permute.xlu0 %278
    %280 = vrot.lane.b32.xlu0 %v273, 32
    %v281 = vpop.permute.xlu0 %280
    %v286 = vrot.slane %v256, 2
    %v287 = vrot.slane %v246, 2
    %v288 = vsel %vm82, %v286, %v287
    %v289 = vrot.slane %v258, 2
    %v290 = vsel %vm82, %v287, %v289
    %v291 = vrot.slane %v257, 2
    %v292 = vrot.slane %v249, 2
    %v293 = vsel %vm82, %v291, %v292
    %v294 = vrot.slane %v259, 2
    %v295 = vsel %vm82, %v292, %v294
    %296 = vrot.lane.b32.xlu0 %v288, 64
    %v297 = vpop.permute.xlu0 %296
    %298 = vrot.lane.b32.xlu0 %v290, 64
    %v299 = vpop.permute.xlu0 %298
    %300 = vrot.lane.b32.xlu0 %v293, 64
    %v301 = vpop.permute.xlu0 %300
    %302 = vrot.lane.b32.xlu0 %v295, 64
    %v303 = vpop.permute.xlu0 %302
    %vm308 = vcmask 261120
    %v309 = vsel %vm308, %v256, %v275
    %v310 = vsel %vm308, %v246, %v277
    %v311 = vsel %vm308, %v257, %v279
    %v312 = vsel %vm308, %v249, %v281
    %vm313 = vcmask 523264
    %v314 = vsel %vm313, %v309, %v297
    %v315 = vsel %vm313, %v310, %v299
    %v316 = vsel %vm313, %v311, %v301
    %v317 = vsel %vm313, %v312, %v303
    %v319 = vlaneseq
    %v320 = vshrl.u32 %v319, 7
    %v321 = vsub.s32 0, %v320
    %v322 = vrot.slane %v239, %v321
    %vm324 = vcmask 785408
    %v326 = vsel %vm324, %v314, 0
    %v329 = vsel %vm324, %v315, 0
    %v332 = vsel %vm324, %v316, 0
    %v335 = vsel %vm324, %v317, 0
    %337 = vmatprep.subr.mxu0 0.0
    %338 = vmatpush1.msra.mxu0 0.0
    %339 = vmatprep.subr.mxu0 0.0
    %340 = vmatpush1.msra.mxu0 0.0
    %341 = vmatprep.subr.mxu0 0.0
    %342 = vmatpush1.msra.mxu0 0.0
    %343 = vmatprep.subr.mxu0 0.0
    %344 = vmatpush1.msra.mxu0 0.0
    %345 = vmatprep.subr.mxu0 0.0
    %346 = vmatpush1.msra.mxu0 %v238
    %347 = vmatprep.subr.mxu0 0.0
    %348 = vmatpush1.msra.mxu0 %v237
    %349 = vmatprep.subr.mxu0 0.0
    %350 = vmatpush1.msra.mxu0 %v236
    %351 = vmatprep.subr.mxu0 0.0
    %352 = vmatpush1.msra.mxu0 %v235
    %353 = vmatprep.subr.mxu0 0.0
    %354 = vmatpush1.msra.mxu0 %v234
    %355 = vmatprep.subr.mxu0 0.0
    %356 = vmatpush1.msra.mxu0 %v233
    %357 = vmatprep.subr.mxu0 0.0
    %358 = vmatpush1.msra.mxu0 %v232
    %359 = vmatprep.subr.mxu0 0.0
    %360 = vmatpush1.msra.mxu0 %v231
    %361 = vmatprep.subr.mxu0 0.0
    %362 = vmatpush1.msra.mxu0 %v230
    %363 = vmatprep.subr.mxu0 0.0
    %364 = vmatpush1.msra.mxu0 %v229
    %365 = vmatprep.subr.mxu0 0.0
    %366 = vmatpush1.msra.mxu0 %v228
    %367 = vmatprep.subr.mxu0 0.0
    %368 = vmatpush1.msra.mxu0 %v227
    %369 = vmatprep.subr.mxu0 0.0
    %370 = vmatpush2.msra.mxu0 0.0
    %371 = vmatprep.subr.mxu0 0.0
    %372 = vmatpush2.msra.mxu0 0.0
    %373 = vmatprep.subr.mxu0 0.0
    %374 = vmatpush2.msra.mxu0 0.0
    %375 = vmatprep.subr.mxu0 0.0
    %376 = vmatpush2.msra.mxu0 0.0
    %377 = vmatprep.subr.mxu0 0.0
    %378 = vmatpush2.msra.mxu0 0.0
    %379 = vmatprep.subr.mxu0 0.0
    %380 = vmatpush2.msra.mxu0 0.0
    %381 = vmatprep.subr.mxu0 0.0
    %382 = vmatpush2.msra.mxu0 0.0
    %383 = vmatprep.subr.mxu0 0.0
    %384 = vmatpush2.msra.mxu0 0.0
    %385 = vmatprep.subr.mxu0 0.0
    %386 = vmatpush2.msra.mxu0 0.0
    %387 = vmatprep.subr.mxu0 0.0
    %388 = vmatpush2.msra.mxu0 0.0
    %389 = vmatprep.subr.mxu0 0.0
    %390 = vmatpush2.msra.mxu0 0.0
    %391 = vmatprep.subr.mxu0 0.0
    %392 = vmatpush2.msra.mxu0 0.0
    %393 = vmatprep.subr.mxu0 0.0
    %394 = vmatpush2.msra.mxu0 0.0
    %395 = vmatprep.subr.mxu0 0.0
    %396 = vmatpush2.msra.mxu0 0.0
    %397 = vmatprep.subr.mxu0 0.0
    %398 = vmatpush2.msra.mxu0 0.0
    %399 = vmatprep.subr.mxu0 0.0
    %400 = vmatpush2.msra.mxu0 0.0
    %401 = vmatprep.mubr.f32.mxu0 0.0
    %402 = vmatmul.mubr.f32.gmra.mxu0 %v326
    %v403 = vpop.f32.mrf.mxu0
    %v404 = vadd.f32 %v322, %v403
    %v405 = vpop.f32.mrf.mxu0
    %406 = vmatprep.mubr.f32.mxu0 0.0
    %407 = vmatmul.mubr.f32.gmra.mxu0 %v329
    %v408 = vpop.f32.mrf.mxu0
    %v409 = vadd.f32 %v322, %v408
    %v410 = vpop.f32.mrf.mxu0
    %411 = vmatprep.mubr.f32.mxu0 0.0
    %412 = vmatmul.mubr.f32.gmra.mxu0 %v332
    %v413 = vpop.f32.mrf.mxu0
    %v414 = vadd.f32 %v322, %v413
    %v415 = vpop.f32.mrf.mxu0
    %416 = vmatprep.mubr.f32.mxu0 0.0
    %417 = vmatmul.mubr.f32.gmra.mxu0 %v335
    %v418 = vpop.f32.mrf.mxu0
    %v419 = vadd.f32 %v322, %v418
    %v420 = vpop.f32.mrf.mxu0
    %421 = vdwg.mxu0
    %v422 = vmax.f32 %v404, 0.0
    %v423 = vmax.f32 %v409, 0.0
    %v424 = vmax.f32 %v414, 0.0
    %v425 = vmax.f32 %v419, 0.0
    %v426 = vld [vmem:[%s5] sm:$0xff]
    %v427 = vld [vmem:[%s5 + $0x8] sm:$0xff]
    %v428 = vld [vmem:[%s5 + $0x10] sm:$0xff]
    %v429 = vld [vmem:[%s5 + $0x18] sm:$0xff]
    %v430 = vld [vmem:[%s5 + $0x20] sm:$0xff]
    %v431 = vld [vmem:[%s5 + $0x28] sm:$0xff]
    %v432 = vld [vmem:[%s5 + $0x30] sm:$0xff]
    %v433 = vld [vmem:[%s5 + $0x38] sm:$0xff]
    %v434 = vld [vmem:[%s5 + $0x40] sm:$0xff]
    %v435 = vld [vmem:[%s5 + $0x48] sm:$0xff]
    %v436 = vld [vmem:[%s5 + $0x50] sm:$0xff]
    %v437 = vld [vmem:[%s5 + $0x58] sm:$0xff]
    %v438 = vld [vmem:[%s6] sm:$0x1]
    %v443 = vrot.slane %v422, 7
    %v444 = vrot.slane %v423, 7
    %v445 = vsel %vm38, %v443, %v444
    %v446 = vrot.slane %v424, 7
    %v447 = vrot.slane %v425, 7
    %v448 = vsel %vm38, %v446, %v447
    %v455 = vsel %vm38, 0.0, %v443
    %v456 = vsel %vm38, 0.0, %v446
    %v457 = vsel %vm38, %v444, 0.0
    %v458 = vsel %vm38, %v447, 0.0
    %v463 = vrot.slane %v455, 1
    %v464 = vrot.slane %v445, 1
    %v465 = vsel %vm59, %v463, %v464
    %v466 = vrot.slane %v457, 1
    %v467 = vsel %vm59, %v464, %v466
    %v468 = vrot.slane %v456, 1
    %v469 = vrot.slane %v448, 1
    %v470 = vsel %vm59, %v468, %v469
    %v471 = vrot.slane %v458, 1
    %v472 = vsel %vm59, %v469, %v471
    %473 = vrot.lane.b32.xlu0 %v465, 32
    %v474 = vpop.permute.xlu0 %473
    %475 = vrot.lane.b32.xlu0 %v467, 32
    %v476 = vpop.permute.xlu0 %475
    %477 = vrot.lane.b32.xlu0 %v470, 32
    %v478 = vpop.permute.xlu0 %477
    %479 = vrot.lane.b32.xlu0 %v472, 32
    %v480 = vpop.permute.xlu0 %479
    %v485 = vrot.slane %v455, 2
    %v486 = vrot.slane %v445, 2
    %v487 = vsel %vm82, %v485, %v486
    %v488 = vrot.slane %v457, 2
    %v489 = vsel %vm82, %v486, %v488
    %v490 = vrot.slane %v456, 2
    %v491 = vrot.slane %v448, 2
    %v492 = vsel %vm82, %v490, %v491
    %v493 = vrot.slane %v458, 2
    %v494 = vsel %vm82, %v491, %v493
    %495 = vrot.lane.b32.xlu0 %v487, 64
    %v496 = vpop.permute.xlu0 %495
    %497 = vrot.lane.b32.xlu0 %v489, 64
    %v498 = vpop.permute.xlu0 %497
    %499 = vrot.lane.b32.xlu0 %v492, 64
    %v500 = vpop.permute.xlu0 %499
    %501 = vrot.lane.b32.xlu0 %v494, 64
    %v502 = vpop.permute.xlu0 %501
    %v507 = vsel %vm308, %v455, %v474
    %v508 = vsel %vm308, %v445, %v476
    %v509 = vsel %vm308, %v456, %v478
    %v510 = vsel %vm308, %v448, %v480
    %v511 = vsel %vm313, %v507, %v496
    %v512 = vsel %vm313, %v508, %v498
    %v513 = vsel %vm313, %v509, %v500
    %v514 = vsel %vm313, %v510, %v502
    %v516 = vlaneseq
    %v517 = vshrl.u32 %v516, 7
    %v518 = vsub.s32 0, %v517
    %v519 = vrot.slane %v438, %v518
    %v522 = vsel %vm324, %v511, 0
    %v525 = vsel %vm324, %v512, 0
    %v528 = vsel %vm324, %v513, 0
    %v531 = vsel %vm324, %v514, 0
    %533 = vmatprep.subr.mxu0 0.0
    %534 = vmatpush1.msra.mxu0 0.0
    %535 = vmatprep.subr.mxu0 0.0
    %536 = vmatpush1.msra.mxu0 0.0
    %537 = vmatprep.subr.mxu0 0.0
    %538 = vmatpush1.msra.mxu0 0.0
    %539 = vmatprep.subr.mxu0 0.0
    %540 = vmatpush1.msra.mxu0 0.0
    %541 = vmatprep.subr.mxu0 0.0
    %542 = vmatpush1.msra.mxu0 %v437
    %543 = vmatprep.subr.mxu0 0.0
    %544 = vmatpush1.msra.mxu0 %v436
    %545 = vmatprep.subr.mxu0 0.0
    %546 = vmatpush1.msra.mxu0 %v435
    %547 = vmatprep.subr.mxu0 0.0
    %548 = vmatpush1.msra.mxu0 %v434
    %549 = vmatprep.subr.mxu0 0.0
    %550 = vmatpush1.msra.mxu0 %v433
    %551 = vmatprep.subr.mxu0 0.0
    %552 = vmatpush1.msra.mxu0 %v432
    %553 = vmatprep.subr.mxu0 0.0
    %554 = vmatpush1.msra.mxu0 %v431
    %555 = vmatprep.subr.mxu0 0.0
    %556 = vmatpush1.msra.mxu0 %v430
    %557 = vmatprep.subr.mxu0 0.0
    %558 = vmatpush1.msra.mxu0 %v429
    %559 = vmatprep.subr.mxu0 0.0
    %560 = vmatpush1.msra.mxu0 %v428
    %561 = vmatprep.subr.mxu0 0.0
    %562 = vmatpush1.msra.mxu0 %v427
    %563 = vmatprep.subr.mxu0 0.0
    %564 = vmatpush1.msra.mxu0 %v426
    %565 = vmatprep.subr.mxu0 0.0
    %566 = vmatpush2.msra.mxu0 0.0
    %567 = vmatprep.subr.mxu0 0.0
    %568 = vmatpush2.msra.mxu0 0.0
    %569 = vmatprep.subr.mxu0 0.0
    %570 = vmatpush2.msra.mxu0 0.0
    %571 = vmatprep.subr.mxu0 0.0
    %572 = vmatpush2.msra.mxu0 0.0
    %573 = vmatprep.subr.mxu0 0.0
    %574 = vmatpush2.msra.mxu0 0.0
    %575 = vmatprep.subr.mxu0 0.0
    %576 = vmatpush2.msra.mxu0 0.0
    %577 = vmatprep.subr.mxu0 0.0
    %578 = vmatpush2.msra.mxu0 0.0
    %579 = vmatprep.subr.mxu0 0.0
    %580 = vmatpush2.msra.mxu0 0.0
    %581 = vmatprep.subr.mxu0 0.0
    %582 = vmatpush2.msra.mxu0 0.0
    %583 = vmatprep.subr.mxu0 0.0
    %584 = vmatpush2.msra.mxu0 0.0
    %585 = vmatprep.subr.mxu0 0.0
    %586 = vmatpush2.msra.mxu0 0.0
    %587 = vmatprep.subr.mxu0 0.0
    %588 = vmatpush2.msra.mxu0 0.0
    %589 = vmatprep.subr.mxu0 0.0
    %590 = vmatpush2.msra.mxu0 0.0
    %591 = vmatprep.subr.mxu0 0.0
    %592 = vmatpush2.msra.mxu0 0.0
    %593 = vmatprep.subr.mxu0 0.0
    %594 = vmatpush2.msra.mxu0 0.0
    %595 = vmatprep.subr.mxu0 0.0
    %596 = vmatpush2.msra.mxu0 0.0
    %597 = vmatprep.mubr.f32.mxu0 0.0
    %598 = vmatmul.mubr.f32.gmra.mxu0 %v522
    %v599 = vpop.f32.mrf.mxu0
    %v600 = vadd.f32 %v519, %v599
    %v601 = vpop.f32.mrf.mxu0
    %602 = vmatprep.mubr.f32.mxu0 0.0
    %603 = vmatmul.mubr.f32.gmra.mxu0 %v525
    %v604 = vpop.f32.mrf.mxu0
    %v605 = vadd.f32 %v519, %v604
    %v606 = vpop.f32.mrf.mxu0
    %607 = vmatprep.mubr.f32.mxu0 0.0
    %608 = vmatmul.mubr.f32.gmra.mxu0 %v528
    %v609 = vpop.f32.mrf.mxu0
    %v610 = vadd.f32 %v519, %v609
    %v611 = vpop.f32.mrf.mxu0
    %612 = vmatprep.mubr.f32.mxu0 0.0
    %613 = vmatmul.mubr.f32.gmra.mxu0 %v531
    %v614 = vpop.f32.mrf.mxu0
    %v615 = vadd.f32 %v519, %v614
    %v616 = vpop.f32.mrf.mxu0
    %617 = vdwg.mxu0
    %v618 = vmax.f32 %v600, 0.0
    %v619 = vmax.f32 %v605, 0.0
    %v620 = vmax.f32 %v610, 0.0
    %v621 = vmax.f32 %v615, 0.0
    %v622 = vsel %vm308, %v618, -inf
    %v623 = vsel %vm308, %v619, -inf
    %v624 = vmax.f32 %v622, %v623
    %v625 = vrot.slane %v624, 4
    %v626 = vmax.f32 %v624, %v625
    %v627 = vrot.slane %v626, 2
    %v628 = vmax.f32 %v626, %v627
    %v629 = vrot.slane %v628, 1
    %v630 = vmax.f32 %v628, %v629
    %v631 = vsel %vm308, %v620, -inf
    %v632 = vsel %vm308, %v621, -inf
    %v633 = vmax.f32 %v631, %v632
    %v634 = vrot.slane %v633, 4
    %v635 = vmax.f32 %v633, %v634
    %v636 = vrot.slane %v635, 2
    %v637 = vmax.f32 %v635, %v636
    %v638 = vrot.slane %v637, 1
    %v639 = vmax.f32 %v637, %v638
    %vm642 = vcmask 1041409
    %v643 = vsel %vm642, %v639, %v630
    %vm645 = vcmask 254976
    %646 = vst.msk [vmem:[#allocation2] sm:$0x3] %vm645, %v643
    // Predicated region
    $region30: #{tpu_custom_call.1} parent=1 // pred_check
      _
    $region31: #{tpu_custom_call.1} parent=1 // pred_check_branch
      %648 = sbr.rel (0) target = $region33
    $region32: #{tpu_custom_call.1} parent=1 // pred_region
      %s650 = ssub.s32 32, 32
      %651 = vsyncadd [#allocation3], %s650
      %s653 = sshll.u32 [#allocation2], 4
      %s654 = int_to_ptr.vmem [resolvable:$true] %s653
      %656 = dma.vmem_to_hbm [thread:$0]  %s654, 32, %s7, [#allocation3]
    $region33: #{tpu_custom_call.1} parent=1 // pred_fallthru
      _
    // Predicated region
    $region34: #{tpu_custom_call.1} parent=1 // pred_check
      _
    $region35: #{tpu_custom_call.1} parent=1 // pred_check_branch
      %658 = sbr.rel (0) target = $region37
    $region36: #{tpu_custom_call.1} parent=1 // pred_region
      %659 = dma.done [#allocation3], 32
    $region37: #{tpu_custom_call.1} parent=1 // pred_fallthru
      _
    %660 = vsyncpa [#allocation3], 1

</llo_original>
